<compile_context>
chip_gen: v7x
topology: tpu7x:2x2x1
jax: 0.10.0
libtpu: 0.0.40
codegen_flags: <defaults>
</compile_context>

<pallas_src>
import jax
import jax.numpy as jnp
from jax.experimental import pallas as pl
from jax.experimental.pallas import tpu as pltpu

KSIZE = 7
PAD = 3


def blanced_attention_kernel(x_ref, w1t_ref, a_ref, w2t_ref, cw_ref, o_ref):
    x = x_ref[...]                                  # (Bt, C, L)
    Bt, C, L = x.shape

    # ---------------- Channel attention (tiny, one batched pass per block) --
    # AdaptiveAvgPool1d(1): mean over L for all Bt batches at once (f32).
    avg = jnp.mean(x.astype(jnp.float32), axis=-1)                  # (Bt, C)
    # fc1: Conv1d(C, Cr, 1, bias=False)  ==  (Bt, C) @ (C, Cr)
    h = jnp.dot(avg, w1t_ref[...], preferred_element_type=jnp.float32)  # (Bt, Cr)
    # PReLU(Cr): per-channel slope broadcast over the Bt batches.
    a = a_ref[...]                                  # (1, Cr)
    h = jnp.where(h > 0, h, a * h)
    # fc2: Conv1d(Cr, C, 1, bias=False)  ==  (Bt, Cr) @ (Cr, C)
    z = jnp.dot(h, w2t_ref[...], preferred_element_type=jnp.float32)    # (Bt, C)
    ca = jax.nn.sigmoid(z)                          # (Bt, C) f32

    # ---------------- Spatial attention (tiny: (Bt, L)) ----------------
    # max over the channel (sublane) dim for all Bt batches.
    m = jnp.max(x, axis=1).astype(jnp.float32)      # (Bt, L)
    idx = jax.lax.broadcasted_iota(jnp.int32, (1, L), 1)
    # Conv1d(1, 1, 7, padding=3, bias=False): cross-correlation with zero pad,
    # as lane-rolls (XLU, off the VPU critical path) + one boundary mask per
    # non-center tap; the center tap needs no roll and no mask.
    y = cw_ref[PAD] * m
    for t in range(KSIZE):
        j = t - PAD                                 # tap offset in [-3, 3]
        if j == 0:
            continue
        shifted = pltpu.roll(m, shift=(-j) % L, axis=1)     # shifted[l] = m[l + j]
        valid = (idx >= -j) if j < 0 else (idx < L - j)     # single boundary check
        y = y + cw_ref[t] * jnp.where(valid, shifted, jnp.float32(0.0))
    sa = jax.nn.sigmoid(y)                          # (Bt, L) f32

    # ---------------- Combine: out = ca * sa * x (full-size VPU work) -------
    gate = (ca[:, :, None] * sa[:, None, :]).astype(x.dtype)   # (Bt, C, L)
    o_ref[...] = (gate * x).astype(o_ref.dtype)


def _choose_block_batch(B, C, L, elem_bytes=4, vmem_budget_bytes=24 << 20):
    """Largest divisor of B whose (Bt, C, L) block keeps the double-buffered
    input + output working set (~4 live blocks) under the VMEM budget, while
    keeping at least 2 grid steps so v7x's two TensorCores both get work."""
    cap = max(1, vmem_budget_bytes // (4 * C * L * elem_bytes))
    if B >= 2:
        cap = min(cap, max(1, B // 2))
    bt = 1
    for d in range(1, min(B, cap) + 1):
        if B % d == 0:
            bt = d
    return bt


def blanced_attention(x, w1, prelu_a, w2, conv_w, *, block_b=None):
    """x: (B, C, L).  w1: (Cr, C) fc1 weight, prelu_a: (Cr, 1) PReLU slopes,
    w2: (C, Cr) fc2 weight, conv_w: (7,) spatial-attention conv taps.

    Correctness relies on the full C and L extents per block (global mean over
    L, max over C, +/-3 conv halo), so only the batch axis is tiled.  L % 128
    == 0 and C % 8 == 0 keep loads/stores unmasked (perf guardrail only —
    other shapes still run correctly)."""
    B, C, L = x.shape
    Cr = w1.shape[0]
    elem_bytes = jnp.dtype(x.dtype).itemsize
    if block_b is None:
        block_b = _choose_block_batch(B, C, L, elem_bytes)
    assert B % block_b == 0, "block_b must divide B"
    grid_b = B // block_b
    # TODO(synk): if B == 1 and a single (C, L) slab exceeds VMEM, a two-pass
    # (reduce-then-gate) formulation tiled over L would be needed.

    # Pre-orient the tiny weights so the kernel needs no in-kernel transposes.
    w1t = jnp.asarray(w1, jnp.float32).T            # (C, Cr)
    w2t = jnp.asarray(w2, jnp.float32).T            # (Cr, C)
    a = jnp.asarray(prelu_a, jnp.float32).reshape(1, Cr)
    cw = jnp.asarray(conv_w, jnp.float32).reshape(KSIZE)

    cost = pl.CostEstimate(
        flops=10 * B * C * L + 4 * B * C * Cr,      # gating + tiny fc1/fc2
        transcendentals=B * (C + L),                # sigmoids
        bytes_accessed=2 * B * C * L * elem_bytes)  # read x + write out

    return pl.pallas_call(
        blanced_attention_kernel,
        out_shape=jax.ShapeDtypeStruct((B, C, L), x.dtype),
        grid=(grid_b,),
        in_specs=[
            pl.BlockSpec((block_b, C, L), lambda b: (b, 0, 0)),
            pl.BlockSpec((C, Cr), lambda b: (0, 0)),
            pl.BlockSpec((1, Cr), lambda b: (0, 0)),
            pl.BlockSpec((Cr, C), lambda b: (0, 0)),
            pl.BlockSpec(memory_space=pltpu.MemorySpace.SMEM),  # conv taps (7,)
        ],
        out_specs=pl.BlockSpec((block_b, C, L), lambda b: (b, 0, 0)),
        compiler_params=pltpu.CompilerParams(
            dimension_semantics=("parallel",),
            vmem_limit_bytes=32 << 20),
        cost_estimate=cost,
    )(x, w1t, a, w2t, cw)


def reference(x, w1, prelu_a, w2, conv_w):
    """Pure-JAX reference mirroring the PyTorch forward."""
    avg = jnp.mean(x, axis=-1, keepdims=True)                 # (B, C, 1)
    h = jnp.einsum('rc,bco->bro', w1, avg)
    h = jnp.where(h > 0, h, prelu_a[None] * h)
    z = jnp.einsum('cr,bro->bco', w2, h)
    ca = jax.nn.sigmoid(z)                                    # (B, C, 1)
    m = jnp.max(x, axis=1, keepdims=True)                     # (B, 1, L)
    mp = jnp.pad(m, ((0, 0), (0, 0), (PAD, PAD)))
    L = x.shape[-1]
    y = sum(conv_w[k] * mp[:, :, k:k + L] for k in range(KSIZE))
    sa = jax.nn.sigmoid(y)                                    # (B, 1, L)
    return ca * sa * x


if __name__ == "__main__":
    B, C, L = 8, 32, 128
    reduction = 16
    Cr = C // reduction

    key = jax.random.PRNGKey(0)
    k1, k2, k3, k4 = jax.random.split(key, 4)
    x = jax.random.normal(k1, (B, C, L), jnp.float32)
    w1 = jax.random.normal(k2, (Cr, C), jnp.float32) * 0.1      # fc1 weight
    w2 = jax.random.normal(k3, (C, Cr), jnp.float32) * 0.1      # fc2 weight
    prelu_a = jnp.full((Cr, 1), 0.25, jnp.float32)              # PReLU default init
    conv_w = jax.random.normal(k4, (KSIZE,), jnp.float32) * 0.2 # SpatialAttention conv

    out = blanced_attention(x, w1, prelu_a, w2, conv_w)
    out = jax.block_until_ready(out)

    ref = reference(x, w1, prelu_a, w2, conv_w)
    assert out.shape == (B, C, L)
    assert jnp.allclose(out, ref, atol=1e-5, rtol=1e-5), "mismatch vs reference"
    print("KERNEL_OK")
</pallas_src>

<mosaic_0001>
module attributes {stable_mosaic.version = 11 : i64} {
  func.func @blanced_attention_kernel(%arg0: i32, %arg1: memref<4x32x128xf32, #tpu.memory_space<vmem>>, %arg2: memref<32x2xf32, #tpu.memory_space<vmem>>, %arg3: memref<1x2xf32, #tpu.memory_space<vmem>>, %arg4: memref<2x32xf32, #tpu.memory_space<vmem>>, %arg5: memref<7xf32, #tpu.memory_space<smem>>, %arg6: memref<4x32x128xf32, #tpu.memory_space<vmem>>) attributes {dimension_semantics = [#tpu.dimension_semantics<parallel>], iteration_bounds = array<i64: 2>, scalar_prefetch = 0 : i64, scratch_operands = 0 : i64, tpu.core_type = #tpu.core_type<tc>, window_params = [{transform_indices = @transform_0, window_bounds = array<i64: 4, 32, 128>}, {pipeline_mode = #tpu.pipeline_mode<synchronous>, transform_indices = @transform_1, window_bounds = array<i64: 32, 2>}, {pipeline_mode = #tpu.pipeline_mode<synchronous>, transform_indices = @transform_2, window_bounds = array<i64: 1, 2>}, {pipeline_mode = #tpu.pipeline_mode<synchronous>, transform_indices = @transform_3, window_bounds = array<i64: 2, 32>}, {transform_indices = @transform_4, window_bounds = array<i64: 7>}, {transform_indices = @transform_5, window_bounds = array<i64: 4, 32, 128>}]} {
    %c0 = arith.constant 0 : index
    %c0_0 = arith.constant 0 : index
    %c0_1 = arith.constant 0 : index
    %0 = vector.load %arg1[%c0, %c0_0, %c0_1] : memref<4x32x128xf32, #tpu.memory_space<vmem>>, vector<4x32x128xf32>
    %cst = arith.constant dense<0.000000e+00> : vector<4x32xf32>
    %1 = vector.multi_reduction <add>, %0, %cst [2] : vector<4x32x128xf32> to vector<4x32xf32>
    %cst_2 = arith.constant 1.280000e+02 : f32
    %2 = vector.broadcast %cst_2 : f32 to vector<4x32xf32>
    %3 = arith.divf %1, %2 : vector<4x32xf32>
    %c0_3 = arith.constant 0 : index
    %c0_4 = arith.constant 0 : index
    %4 = vector.load %arg2[%c0_3, %c0_4] : memref<32x2xf32, #tpu.memory_space<vmem>>, vector<32x2xf32>
    %cst_5 = arith.constant dense<0.000000e+00> : vector<4x2xf32>
    %5 = tpu.matmul %3, %4, %cst_5 {dimension_numbers = #tpu.dot_dimension_numbers<[1], [0], [0], [1], [0, 0, 1, 1], [], []>} : vector<4x32xf32>, vector<32x2xf32>, vector<4x2xf32> -> vector<4x2xf32>
    %c0_6 = arith.constant 0 : index
    %c0_7 = arith.constant 0 : index
    %6 = vector.load %arg3[%c0_6, %c0_7] : memref<1x2xf32, #tpu.memory_space<vmem>>, vector<1x2xf32>
    %cst_8 = arith.constant 0.000000e+00 : f32
    %7 = vector.broadcast %cst_8 : f32 to vector<4x2xf32>
    %8 = arith.cmpf ogt, %5, %7 : vector<4x2xf32>
    %9 = vector.broadcast %6 : vector<1x2xf32> to vector<4x2xf32>
    %10 = arith.mulf %9, %5 : vector<4x2xf32>
    %11 = arith.select %8, %5, %10 : vector<4x2xi1>, vector<4x2xf32>
    %c0_9 = arith.constant 0 : index
    %c0_10 = arith.constant 0 : index
    %12 = vector.load %arg4[%c0_9, %c0_10] : memref<2x32xf32, #tpu.memory_space<vmem>>, vector<2x32xf32>
    %cst_11 = arith.constant dense<0.000000e+00> : vector<4x32xf32>
    %13 = tpu.matmul %11, %12, %cst_11 {dimension_numbers = #tpu.dot_dimension_numbers<[1], [0], [0], [1], [0, 0, 1, 1], [], []>} : vector<4x2xf32>, vector<2x32xf32>, vector<4x32xf32> -> vector<4x32xf32>
    %14 = arith.negf %13 : vector<4x32xf32>
    %15 = math.exp %14 : vector<4x32xf32>
    %cst_12 = arith.constant 1.000000e+00 : f32
    %16 = vector.broadcast %cst_12 : f32 to vector<4x32xf32>
    %17 = arith.addf %16, %15 : vector<4x32xf32>
    %18 = arith.divf %16, %17 : vector<4x32xf32>
    %cst_13 = arith.constant dense<0xFF800000> : vector<4x128xf32>
    %19 = vector.multi_reduction <maximumf>, %0, %cst_13 [1] : vector<4x32x128xf32> to vector<4x128xf32>
    %20 = tpu.iota {dimensions = array<i32: 1>} : vector<1x128xi32>
    %c3 = arith.constant 3 : index
    %21 = memref.load %arg5[%c3] : memref<7xf32, #tpu.memory_space<smem>>
    %22 = vector.broadcast %21 : f32 to vector<4x128xf32>
    %23 = arith.mulf %22, %19 : vector<4x128xf32>
    %c3_i32 = arith.constant 3 : i32
    %24 = tpu.dynamic_rotate %19 by %c3_i32 dim 1 : vector<4x128xf32>, i32 -> vector<4x128xf32>
    %c3_i32_14 = arith.constant 3 : i32
    %25 = vector.broadcast %c3_i32_14 : i32 to vector<1x128xi32>
    %26 = arith.cmpi sge, %20, %25 : vector<1x128xi32>
    %c0_15 = arith.constant 0 : index
    %27 = memref.load %arg5[%c0_15] : memref<7xf32, #tpu.memory_space<smem>>
    %cst_16 = arith.constant 0.000000e+00 : f32
    %28 = vector.shape_cast %26 : vector<1x128xi1> to vector<1x128xi1>
    %29 = vector.broadcast %28 : vector<1x128xi1> to vector<4x128xi1>
    %30 = vector.broadcast %cst_16 : f32 to vector<4x128xf32>
    %31 = arith.select %29, %24, %30 : vector<4x128xi1>, vector<4x128xf32>
    %32 = vector.broadcast %27 : f32 to vector<4x128xf32>
    %33 = arith.mulf %32, %31 : vector<4x128xf32>
    %34 = arith.addf %23, %33 : vector<4x128xf32>
    %c2_i32 = arith.constant 2 : i32
    %35 = tpu.dynamic_rotate %19 by %c2_i32 dim 1 : vector<4x128xf32>, i32 -> vector<4x128xf32>
    %c2_i32_17 = arith.constant 2 : i32
    %36 = vector.broadcast %c2_i32_17 : i32 to vector<1x128xi32>
    %37 = arith.cmpi sge, %20, %36 : vector<1x128xi32>
    %c1 = arith.constant 1 : index
    %38 = memref.load %arg5[%c1] : memref<7xf32, #tpu.memory_space<smem>>
    %cst_18 = arith.constant 0.000000e+00 : f32
    %39 = vector.shape_cast %37 : vector<1x128xi1> to vector<1x128xi1>
    %40 = vector.broadcast %39 : vector<1x128xi1> to vector<4x128xi1>
    %41 = vector.broadcast %cst_18 : f32 to vector<4x128xf32>
    %42 = arith.select %40, %35, %41 : vector<4x128xi1>, vector<4x128xf32>
    %43 = vector.broadcast %38 : f32 to vector<4x128xf32>
    %44 = arith.mulf %43, %42 : vector<4x128xf32>
    %45 = arith.addf %34, %44 : vector<4x128xf32>
    %c1_i32 = arith.constant 1 : i32
    %46 = tpu.dynamic_rotate %19 by %c1_i32 dim 1 : vector<4x128xf32>, i32 -> vector<4x128xf32>
    %c1_i32_19 = arith.constant 1 : i32
    %47 = vector.broadcast %c1_i32_19 : i32 to vector<1x128xi32>
    %48 = arith.cmpi sge, %20, %47 : vector<1x128xi32>
    %c2 = arith.constant 2 : index
    %49 = memref.load %arg5[%c2] : memref<7xf32, #tpu.memory_space<smem>>
    %cst_20 = arith.constant 0.000000e+00 : f32
    %50 = vector.shape_cast %48 : vector<1x128xi1> to vector<1x128xi1>
    %51 = vector.broadcast %50 : vector<1x128xi1> to vector<4x128xi1>
    %52 = vector.broadcast %cst_20 : f32 to vector<4x128xf32>
    %53 = arith.select %51, %46, %52 : vector<4x128xi1>, vector<4x128xf32>
    %54 = vector.broadcast %49 : f32 to vector<4x128xf32>
    %55 = arith.mulf %54, %53 : vector<4x128xf32>
    %56 = arith.addf %45, %55 : vector<4x128xf32>
    %c127_i32 = arith.constant 127 : i32
    %57 = tpu.dynamic_rotate %19 by %c127_i32 dim 1 : vector<4x128xf32>, i32 -> vector<4x128xf32>
    %c127_i32_21 = arith.constant 127 : i32
    %58 = vector.broadcast %c127_i32_21 : i32 to vector<1x128xi32>
    %59 = arith.cmpi slt, %20, %58 : vector<1x128xi32>
    %c4 = arith.constant 4 : index
    %60 = memref.load %arg5[%c4] : memref<7xf32, #tpu.memory_space<smem>>
    %cst_22 = arith.constant 0.000000e+00 : f32
    %61 = vector.shape_cast %59 : vector<1x128xi1> to vector<1x128xi1>
    %62 = vector.broadcast %61 : vector<1x128xi1> to vector<4x128xi1>
    %63 = vector.broadcast %cst_22 : f32 to vector<4x128xf32>
    %64 = arith.select %62, %57, %63 : vector<4x128xi1>, vector<4x128xf32>
    %65 = vector.broadcast %60 : f32 to vector<4x128xf32>
    %66 = arith.mulf %65, %64 : vector<4x128xf32>
    %67 = arith.addf %56, %66 : vector<4x128xf32>
    %c126_i32 = arith.constant 126 : i32
    %68 = tpu.dynamic_rotate %19 by %c126_i32 dim 1 : vector<4x128xf32>, i32 -> vector<4x128xf32>
    %c126_i32_23 = arith.constant 126 : i32
    %69 = vector.broadcast %c126_i32_23 : i32 to vector<1x128xi32>
    %70 = arith.cmpi slt, %20, %69 : vector<1x128xi32>
    %c5 = arith.constant 5 : index
    %71 = memref.load %arg5[%c5] : memref<7xf32, #tpu.memory_space<smem>>
    %cst_24 = arith.constant 0.000000e+00 : f32
    %72 = vector.shape_cast %70 : vector<1x128xi1> to vector<1x128xi1>
    %73 = vector.broadcast %72 : vector<1x128xi1> to vector<4x128xi1>
    %74 = vector.broadcast %cst_24 : f32 to vector<4x128xf32>
    %75 = arith.select %73, %68, %74 : vector<4x128xi1>, vector<4x128xf32>
    %76 = vector.broadcast %71 : f32 to vector<4x128xf32>
    %77 = arith.mulf %76, %75 : vector<4x128xf32>
    %78 = arith.addf %67, %77 : vector<4x128xf32>
    %c125_i32 = arith.constant 125 : i32
    %79 = tpu.dynamic_rotate %19 by %c125_i32 dim 1 : vector<4x128xf32>, i32 -> vector<4x128xf32>
    %c125_i32_25 = arith.constant 125 : i32
    %80 = vector.broadcast %c125_i32_25 : i32 to vector<1x128xi32>
    %81 = arith.cmpi slt, %20, %80 : vector<1x128xi32>
    %c6 = arith.constant 6 : index
    %82 = memref.load %arg5[%c6] : memref<7xf32, #tpu.memory_space<smem>>
    %cst_26 = arith.constant 0.000000e+00 : f32
    %83 = vector.shape_cast %81 : vector<1x128xi1> to vector<1x128xi1>
    %84 = vector.broadcast %83 : vector<1x128xi1> to vector<4x128xi1>
    %85 = vector.broadcast %cst_26 : f32 to vector<4x128xf32>
    %86 = arith.select %84, %79, %85 : vector<4x128xi1>, vector<4x128xf32>
    %87 = vector.broadcast %82 : f32 to vector<4x128xf32>
    %88 = arith.mulf %87, %86 : vector<4x128xf32>
    %89 = arith.addf %78, %88 : vector<4x128xf32>
    %90 = arith.negf %89 : vector<4x128xf32>
    %91 = math.exp %90 : vector<4x128xf32>
    %cst_27 = arith.constant 1.000000e+00 : f32
    %92 = vector.broadcast %cst_27 : f32 to vector<4x128xf32>
    %93 = arith.addf %92, %91 : vector<4x128xf32>
    %94 = arith.divf %92, %93 : vector<4x128xf32>
    %95 = vector.shape_cast %18 : vector<4x32xf32> to vector<4x32x1xf32>
    %96 = vector.shape_cast %94 : vector<4x128xf32> to vector<4x1x128xf32>
    %97 = vector.broadcast %95 : vector<4x32x1xf32> to vector<4x32x128xf32>
    %98 = vector.broadcast %96 : vector<4x1x128xf32> to vector<4x32x128xf32>
    %99 = arith.mulf %97, %98 : vector<4x32x128xf32>
    %100 = arith.mulf %99, %0 : vector<4x32x128xf32>
    %c0_28 = arith.constant 0 : index
    %c0_29 = arith.constant 0 : index
    %c0_30 = arith.constant 0 : index
    %101 = vector.load %arg6[%c0_28, %c0_29, %c0_30] : memref<4x32x128xf32, #tpu.memory_space<vmem>>, vector<4x32x128xf32>
    tpu.vector_store %arg6[%c0_28, %c0_29, %c0_30], %100 {strides = array<i32>} : memref<4x32x128xf32, #tpu.memory_space<vmem>>, vector<4x32x128xf32>,
    return
  }
  func.func @transform_0(%arg0: i32) -> (i32, i32, i32) {
    %c0_i32 = arith.constant 0 : i32
    %c0_i32_0 = arith.constant 0 : i32
    %c0_i32_1 = arith.constant 0 : i32
    return %arg0, %c0_i32, %c0_i32_0 : i32, i32, i32
  }
  func.func @transform_1(%arg0: i32) -> (i32, i32) {
    %c0_i32 = arith.constant 0 : i32
    %c0_i32_0 = arith.constant 0 : i32
    %c0_i32_1 = arith.constant 0 : i32
    return %c0_i32, %c0_i32_0 : i32, i32
  }
  func.func @transform_2(%arg0: i32) -> (i32, i32) {
    %c0_i32 = arith.constant 0 : i32
    %c0_i32_0 = arith.constant 0 : i32
    %c0_i32_1 = arith.constant 0 : i32
    return %c0_i32, %c0_i32_0 : i32, i32
  }
  func.func @transform_3(%arg0: i32) -> (i32, i32) {
    %c0_i32 = arith.constant 0 : i32
    %c0_i32_0 = arith.constant 0 : i32
    %c0_i32_1 = arith.constant 0 : i32
    return %c0_i32, %c0_i32_0 : i32, i32
  }
  func.func @transform_4(%arg0: i32) -> i32 {
    %c0_i32 = arith.constant 0 : i32
    %c0_i32_0 = arith.constant 0 : i32
    return %c0_i32 : i32
  }
  func.func @transform_5(%arg0: i32) -> (i32, i32, i32) {
    %c0_i32 = arith.constant 0 : i32
    %c0_i32_0 = arith.constant 0 : i32
    %c0_i32_1 = arith.constant 0 : i32
    return %arg0, %c0_i32, %c0_i32_0 : i32, i32, i32
  }
}

</mosaic_0001>

<llo_original>
// kernel: tpu_custom_call.1
$region0: #{tpu_custom_call.1}
  #allocation0 [shape = 'u32[]', space=smem, size = 0x4, offset = 0x4, fixed_abs, tag = 'smem constant byte address 0x4 - core index']
  #allocation1 [shape = 'u32[144,128]{1,0:T(1,128)}', space=vmem, size = 0x12000, scoped, tag = 'internal scratch']
  %s0 = inlined_call_operand.hbm [shape: f32[8,32,128], index: 0, kind: input, shape index: {}]
  %s1 = inlined_call_operand.vmem [shape: f32[32,2], index: 1, kind: input, shape index: {}]
  %s2 = inlined_call_operand.vmem [shape: f32[1,2], index: 2, kind: input, shape index: {}]
  %s3 = inlined_call_operand.vmem [shape: f32[2,32], index: 3, kind: input, shape index: {}]
  %s4 = inlined_call_operand.vmem [shape: f32[7], index: 4, kind: input, shape index: {}]
  %s5 = inlined_call_operand.hbm [shape: f32[8,32,128], index: 5, kind: output, shape index: {}]
  %s6 = sld [smem:[#allocation0]]
  $region61: #{tpu_custom_call.1} parent=0
    _
  %s8 = ssub.s32 1, %s6
  %s9 = scalar_select 0, %s8, %s6
  $region1: #{tpu_custom_call.1} parent=0
    #allocation2 [shape = 'u8[131072]{0}', space=vmem, size = 0x20000, scoped, tag = 'input window, operand 0']
    #allocation3 [shape = 's32[2]{0}', space=sflag, size = 0x8, scoped, tag = 'scoped memory for tpu_custom_call.1']
    #allocation4 [shape = 's32[2]{0}', space=sflag, size = 0x8, scoped, tag = 'scoped memory for tpu_custom_call.1']
    #allocation5 [shape = 's32[2]{0}', space=sflag, size = 0x8, scoped, tag = 'scoped memory for tpu_custom_call.1']
    #allocation6 [shape = 'u8[512]{0}', space=smem, size = 0x200, scoped, tag = 'input window, operand 4, single buffered']
    #allocation7 [shape = 'u8[131072]{0}', space=vmem, size = 0x20000, scoped, tag = 'output window, operand 0']
    %10 = vsyncpa [#allocation3], 0
    %s11 = scalar_lea.sflag [#allocation3], 1
    %12 = vsyncpa %s11, 0
    %13 = vsyncpa [#allocation5], 0
    %14 = vsyncpa [#allocation4], 0
    %s15 = scalar_lea.sflag [#allocation4], 1
    %16 = vsyncpa %s15, 0
    loop: start=0, step=1, limit=4
    $region2: #{tpu_custom_call.1} parent=1 // loop_pre_header
      _
    $region3: #{tpu_custom_call.1} parent=1 // loop_header
      %s18 = sphi 0, %s22
      %p19 = scmp.ge.s32.totalorder %s18, 4
      %s28 = sphi 0, %s30
      %s31 = sphi 0, %s28
      %s32 = sphi 0, %s31
      %s48 = sphi 0, %s32
      %s52 = sphi 0, %s52
      %s54 = sphi 0, %s52
      %s55 = sphi 0, %s54
      %s69 = sphi 0, %s55
      %s73 = sphi 0, %s73
      %s75 = sphi 0, %s73
      %s76 = sphi 0, %s75
      %s90 = sphi 0, %s76
      %s94 = sphi 0, %s94
      %s96 = sphi 0, %s94
      %s97 = sphi 0, %s96
      %s111 = sphi 0, %s97
      %s115 = sphi 0, %s115
      %s117 = sphi 0, %s115
      %s118 = sphi 0, %s117
      %s132 = sphi 0, %s118
      %s138 = sphi 0, %s140
      %s141 = sphi 0, %s138
      %s142 = sphi 0, %s141
      %s158 = sphi 0, %s142
    $region4: #{tpu_custom_call.1} parent=1 // loop_header_branch
      %21 = sbr.rel (%p19) target = $region8
    $region5: #{tpu_custom_call.1} parent=1 // loop_body
      %s23 = ssub.s32 %s18, 1
      %s24 = ssub.s32 %s18, 2
      %s25 = sadd.s32 %s18, 1
      %s26 = ssub.s32 %s18, %s25
      %p27 = scmp.eq.s32.totalorder %s26, 0
      %s29 = sadd.s32 %s28, 1
      %s30 = scalar_select %p27, %s28, %s29
      %p33 = pneg %p27
      %p34 = scmp.eq.s32.totalorder %s18, 1
      %p35 = por %p33, %p34
      %p36 = scmp.ne.s32.totalorder %s28, %s31
      %p37 = scmp.eq.s32.totalorder %s18, 0
      %p38 = por %p36, %p37
      %p39 = scmp.ne.s32.totalorder %s28, %s31
      %p40 = scmp.eq.s32.totalorder %s23, 1
      %p41 = por %p39, %p40
      %p42 = scmp.ne.s32.totalorder %s31, %s32
      %p43 = scmp.eq.s32.totalorder %s23, 0
      %p44 = por %p42, %p43
      %p45 = scmp.ne.s32.totalorder %s31, %s32
      %p46 = scmp.eq.s32.totalorder %s24, 1
      %p47 = por %p45, %p46
      %p49 = scmp.ne.s32.totalorder %s32, %s48
      %p50 = scmp.eq.s32.totalorder %s24, 0
      %p51 = por %p49, %p50
      %s53 = sadd.s32 %s52, 1
      %p56 = scmp.eq.s32.totalorder %s18, 1
      %p57 = scmp.ne.s32.totalorder %s52, %s54
      %p58 = scmp.eq.s32.totalorder %s18, 0
      %p59 = por %p57, %p58
      %p60 = scmp.ne.s32.totalorder %s52, %s54
      %p61 = scmp.eq.s32.totalorder %s23, 1
      %p62 = por %p60, %p61
      %p63 = scmp.ne.s32.totalorder %s54, %s55
      %p64 = scmp.eq.s32.totalorder %s23, 0
      %p65 = por %p63, %p64
      %p66 = scmp.ne.s32.totalorder %s54, %s55
      %p67 = scmp.eq.s32.totalorder %s24, 1
      %p68 = por %p66, %p67
      %p70 = scmp.ne.s32.totalorder %s55, %s69
      %p71 = scmp.eq.s32.totalorder %s24, 0
      %p72 = por %p70, %p71
      %s74 = sadd.s32 %s73, 1
      %p77 = scmp.eq.s32.totalorder %s18, 1
      %p78 = scmp.ne.s32.totalorder %s73, %s75
      %p79 = scmp.eq.s32.totalorder %s18, 0
      %p80 = por %p78, %p79
      %p81 = scmp.ne.s32.totalorder %s73, %s75
      %p82 = scmp.eq.s32.totalorder %s23, 1
      %p83 = por %p81, %p82
      %p84 = scmp.ne.s32.totalorder %s75, %s76
      %p85 = scmp.eq.s32.totalorder %s23, 0
      %p86 = por %p84, %p85
      %p87 = scmp.ne.s32.totalorder %s75, %s76
      %p88 = scmp.eq.s32.totalorder %s24, 1
      %p89 = por %p87, %p88
      %p91 = scmp.ne.s32.totalorder %s76, %s90
      %p92 = scmp.eq.s32.totalorder %s24, 0
      %p93 = por %p91, %p92
      %s95 = sadd.s32 %s94, 1
      %p98 = scmp.eq.s32.totalorder %s18, 1
      %p99 = scmp.ne.s32.totalorder %s94, %s96
      %p100 = scmp.eq.s32.totalorder %s18, 0
      %p101 = por %p99, %p100
      %p102 = scmp.ne.s32.totalorder %s94, %s96
      %p103 = scmp.eq.s32.totalorder %s23, 1
      %p104 = por %p102, %p103
      %p105 = scmp.ne.s32.totalorder %s96, %s97
      %p106 = scmp.eq.s32.totalorder %s23, 0
      %p107 = por %p105, %p106
      %p108 = scmp.ne.s32.totalorder %s96, %s97
      %p109 = scmp.eq.s32.totalorder %s24, 1
      %p110 = por %p108, %p109
      %p112 = scmp.ne.s32.totalorder %s97, %s111
      %p113 = scmp.eq.s32.totalorder %s24, 0
      %p114 = por %p112, %p113
      %s116 = sadd.s32 %s115, 1
      %p119 = scmp.eq.s32.totalorder %s18, 1
      %p120 = scmp.ne.s32.totalorder %s115, %s117
      %p121 = scmp.eq.s32.totalorder %s18, 0
      %p122 = por %p120, %p121
      %p123 = scmp.ne.s32.totalorder %s115, %s117
      %p124 = scmp.eq.s32.totalorder %s23, 1
      %p125 = por %p123, %p124
      %p126 = scmp.ne.s32.totalorder %s117, %s118
      %p127 = scmp.eq.s32.totalorder %s23, 0
      %p128 = por %p126, %p127
      %p129 = scmp.ne.s32.totalorder %s117, %s118
      %p130 = scmp.eq.s32.totalorder %s24, 1
      %p131 = por %p129, %p130
      %p133 = scmp.ne.s32.totalorder %s118, %s132
      %p134 = scmp.eq.s32.totalorder %s24, 0
      %p135 = por %p133, %p134
      %s136 = ssub.s32 %s18, %s25
      %p137 = scmp.eq.s32.totalorder %s136, 0
      %s139 = sadd.s32 %s138, 1
      %s140 = scalar_select %p137, %s138, %s139
      %p143 = pneg %p137
      %p144 = scmp.eq.s32.totalorder %s18, 1
      %p145 = por %p143, %p144
      %p146 = scmp.ne.s32.totalorder %s138, %s141
      %p147 = scmp.eq.s32.totalorder %s18, 0
      %p148 = por %p146, %p147
      %p149 = scmp.ne.s32.totalorder %s138, %s141
      %p150 = scmp.eq.s32.totalorder %s23, 1
      %p151 = por %p149, %p150
      %p152 = scmp.ne.s32.totalorder %s141, %s142
      %p153 = scmp.eq.s32.totalorder %s23, 0
      %p154 = por %p152, %p153
      %p155 = scmp.ne.s32.totalorder %s141, %s142
      %p156 = scmp.eq.s32.totalorder %s24, 1
      %p157 = por %p155, %p156
      %p159 = scmp.ne.s32.totalorder %s142, %s158
      %p160 = scmp.eq.s32.totalorder %s24, 0
      %p161 = por %p159, %p160
      %p162 = scmp.le.s32.totalorder 1, %s18
      %p163 = scmp.lt.s32.totalorder %s18, 3
      %p164 = pnand %p162, %p163
      %p165 = pneg %p164
      // Predicated region
      $region9: #{tpu_custom_call.1} parent=5 // pred_check
        _
      $region10: #{tpu_custom_call.1} parent=5 // pred_check_branch
        %167 = sbr.rel (%p164) target = $region12
      $region11: #{tpu_custom_call.1} parent=5 // pred_region
        %s168 = ssub.s32 %s18, 1
        // Predicated region
        $region13: #{tpu_custom_call.1} parent=11 // pred_check
          %p169 = pneg %p65
        $region14: #{tpu_custom_call.1} parent=11 // pred_check_branch
          %171 = sbr.rel (%p169) target = $region16
        $region15: #{tpu_custom_call.1} parent=11 // pred_region
          _
        $region16: #{tpu_custom_call.1} parent=11 // pred_fallthru
          _
        // Predicated region
        $region17: #{tpu_custom_call.1} parent=11 // pred_check
          %p172 = pneg %p86
        $region18: #{tpu_custom_call.1} parent=11 // pred_check_branch
          %174 = sbr.rel (%p172) target = $region20
        $region19: #{tpu_custom_call.1} parent=11 // pred_region
          _
        $region20: #{tpu_custom_call.1} parent=11 // pred_fallthru
          _
        // Predicated region
        $region21: #{tpu_custom_call.1} parent=11 // pred_check
          %p175 = pneg %p107
        $region22: #{tpu_custom_call.1} parent=11 // pred_check_branch
          %177 = sbr.rel (%p175) target = $region24
        $region23: #{tpu_custom_call.1} parent=11 // pred_region
          _
        $region24: #{tpu_custom_call.1} parent=11 // pred_fallthru
          _
        // Predicated region
        $region25: #{tpu_custom_call.1} parent=11 // pred_check
          %p178 = pneg %p128
        $region26: #{tpu_custom_call.1} parent=11 // pred_check_branch
          %180 = sbr.rel (%p178) target = $region28
        $region27: #{tpu_custom_call.1} parent=11 // pred_region
          %s182 = ssub.s32 16, 16
          %183 = vsyncadd [#allocation5], %s182
          %s185 = sshll.u32 %s4, 4
          %s186 = int_to_ptr.vmem [resolvable:$true] %s185
          %188 = dma.vmem_to_smem %s186, 16, [#allocation6], [#allocation5]
        $region28: #{tpu_custom_call.1} parent=11 // pred_fallthru
          _
      $region12: #{tpu_custom_call.1} parent=5 // pred_fallthru
        _
      %p189 = scmp.lt.s32.totalorder %s18, 2
      // Predicated region
      $region29: #{tpu_custom_call.1} parent=5 // pred_check
        %p190 = pneg %p189
      $region30: #{tpu_custom_call.1} parent=5 // pred_check_branch
        %192 = sbr.rel (%p190) target = $region32
      $region31: #{tpu_custom_call.1} parent=5 // pred_region
        // Predicated region
        $region33: #{tpu_custom_call.1} parent=31 // pred_check
          %p193 = pneg %p38
        $region34: #{tpu_custom_call.1} parent=31 // pred_check_branch
          %195 = sbr.rel (%p193) target = $region36
        $region35: #{tpu_custom_call.1} parent=31 // pred_region
          %s196 = sand.u32 %s28, 1
          %s197 = scalar_lea.sflag [#allocation3], %s196
          %s198 = sand.u32 %s28, 1
          %s199 = smul.addr %s198, 128
          %s200 = scalar_lea.vmem [#allocation2], %s199
          %s201 = smul.u32 4, %s18
          %s203 = ssub.s32 2048, 2048
          %204 = vsyncadd %s197, %s203
          %s205 = smul.addr %s201, 4
          %s206 = smul.addr %s205, 128
          %s207 = scalar_lea.hbm %s0, %s206
          %s208 = sshll.u32 %s200, 4
          %s209 = int_to_ptr.vmem [resolvable:$true] %s208
          %214 = dma.hbm_to_vmem [thread:$0]  %s207, 2048, %s209, %s197, 128, 128, 8
        $region36: #{tpu_custom_call.1} parent=31 // pred_fallthru
          _
      $region32: #{tpu_custom_call.1} parent=5 // pred_fallthru
        _
      %p215 = scmp.le.s32.totalorder 1, %s18
      %p216 = scmp.lt.s32.totalorder %s18, 3
      %p217 = pnand %p215, %p216
      %p218 = pneg %p217
      // Predicated region
      $region37: #{tpu_custom_call.1} parent=5 // pred_check
        _
      $region38: #{tpu_custom_call.1} parent=5 // pred_check_branch
        %220 = sbr.rel (%p217) target = $region40
      $region39: #{tpu_custom_call.1} parent=5 // pred_region
        %s221 = ssub.s32 %s18, 1
        %s222 = sand.u32 %s31, 1
        %s223 = scalar_lea.sflag [#allocation3], %s222
        %s224 = sand.u32 %s31, 1
        %s225 = smul.addr %s224, 128
        %s226 = scalar_lea.vmem [#allocation2], %s225
        // Predicated region
        $region41: #{tpu_custom_call.1} parent=39 // pred_check
          %p227 = pneg %p44
        $region42: #{tpu_custom_call.1} parent=39 // pred_check_branch
          %229 = sbr.rel (%p227) target = $region44
        $region43: #{tpu_custom_call.1} parent=39 // pred_region
          %230 = dma.done %s223, 2048
        $region44: #{tpu_custom_call.1} parent=39 // pred_fallthru
          _
        // Predicated region
        $region45: #{tpu_custom_call.1} parent=39 // pred_check
          %p231 = pneg %p128
        $region46: #{tpu_custom_call.1} parent=39 // pred_check_branch
          %233 = sbr.rel (%p231) target = $region48
        $region47: #{tpu_custom_call.1} parent=39 // pred_region
          %234 = dma.done [#allocation5], 16
        $region48: #{tpu_custom_call.1} parent=39 // pred_fallthru
          _
        %235 = sfence
        %s236 = sand.u32 %s31, 1
        %s237 = scalar_lea.sflag [#allocation3], %s236
        %s238 = sand.u32 %s31, 1
        %s239 = smul.addr %s238, 128
        %s240 = scalar_lea.vmem [#allocation2], %s239
        %p241 = pneg %p44
        %p242 = pneg %p41
        %p243 = pneg %p65
        %p244 = pneg %p62
        %p245 = pneg %p86
        %p246 = pneg %p83
        %p247 = pneg %p107
        %p248 = pneg %p104
        %p249 = pneg %p128
        %p250 = pneg %p125
        %p251 = pneg %p154
        %p252 = pneg %p151
        %s253 = sand.u32 %s141, 1
        %s254 = scalar_lea.sflag [#allocation4], %s253
        %s255 = sand.u32 %s141, 1
        %s256 = smul.addr %s255, 128
        %s257 = scalar_lea.vmem [#allocation7], %s256
        %s258 = smul.u32 4, %s23
        %s259 = smul.u32 4, %s23
        %v260 = vld [vmem:[%s226] sm:$0xff]
        %v261 = vld [vmem:[%s226 + $0x8] sm:$0xff]
        %v262 = vld [vmem:[%s226 + $0x10] sm:$0xff]
        %v263 = vld [vmem:[%s226 + $0x18] sm:$0xff]
        %v264 = vld [vmem:[%s226 + $0x20] sm:$0xff]
        %v265 = vld [vmem:[%s226 + $0x28] sm:$0xff]
        %v266 = vld [vmem:[%s226 + $0x30] sm:$0xff]
        %v267 = vld [vmem:[%s226 + $0x38] sm:$0xff]
        %v268 = vld [vmem:[%s226 + $0x40] sm:$0xff]
        %v269 = vld [vmem:[%s226 + $0x48] sm:$0xff]
        %v270 = vld [vmem:[%s226 + $0x50] sm:$0xff]
        %v271 = vld [vmem:[%s226 + $0x58] sm:$0xff]
        %v272 = vld [vmem:[%s226 + $0x60] sm:$0xff]
        %v273 = vld [vmem:[%s226 + $0x68] sm:$0xff]
        %v274 = vld [vmem:[%s226 + $0x70] sm:$0xff]
        %v275 = vld [vmem:[%s226 + $0x78] sm:$0xff]
        %276 = vadd.xlane.f32.xlu0 %v260
        %v277 = vpop.xlane.xlu0 %276
        %278 = vadd.xlane.f32.xlu0 %v261
        %v279 = vpop.xlane.xlu0 %278
        %280 = vadd.xlane.f32.xlu0 %v262
        %v281 = vpop.xlane.xlu0 %280
        %282 = vadd.xlane.f32.xlu0 %v263
        %v283 = vpop.xlane.xlu0 %282
        %284 = vadd.xlane.f32.xlu0 %v264
        %v285 = vpop.xlane.xlu0 %284
        %286 = vadd.xlane.f32.xlu0 %v265
        %v287 = vpop.xlane.xlu0 %286
        %288 = vadd.xlane.f32.xlu0 %v266
        %v289 = vpop.xlane.xlu0 %288
        %290 = vadd.xlane.f32.xlu0 %v267
        %v291 = vpop.xlane.xlu0 %290
        %292 = vadd.xlane.f32.xlu0 %v268
        %v293 = vpop.xlane.xlu0 %292
        %294 = vadd.xlane.f32.xlu0 %v269
        %v295 = vpop.xlane.xlu0 %294
        %296 = vadd.xlane.f32.xlu0 %v270
        %v297 = vpop.xlane.xlu0 %296
        %298 = vadd.xlane.f32.xlu0 %v271
        %v299 = vpop.xlane.xlu0 %298
        %300 = vadd.xlane.f32.xlu0 %v272
        %v301 = vpop.xlane.xlu0 %300
        %302 = vadd.xlane.f32.xlu0 %v273
        %v303 = vpop.xlane.xlu0 %302
        %304 = vadd.xlane.f32.xlu0 %v274
        %v305 = vpop.xlane.xlu0 %304
        %306 = vadd.xlane.f32.xlu0 %v275
        %v307 = vpop.xlane.xlu0 %306
        %v308 = vrcp.pop 128.0
        %v309 = vmul.f32 %v277, %v308
        %v310 = vmul.f32 %v279, %v308
        %v311 = vmul.f32 %v281, %v308
        %v312 = vmul.f32 %v283, %v308
        %v313 = vmul.f32 %v285, %v308
        %v314 = vmul.f32 %v287, %v308
        %v315 = vmul.f32 %v289, %v308
        %v316 = vmul.f32 %v291, %v308
        %v317 = vmul.f32 %v293, %v308
        %v318 = vmul.f32 %v295, %v308
        %v319 = vmul.f32 %v297, %v308
        %v320 = vmul.f32 %v299, %v308
        %v321 = vmul.f32 %v301, %v308
        %v322 = vmul.f32 %v303, %v308
        %v323 = vmul.f32 %v305, %v308
        %v324 = vmul.f32 %v307, %v308
        %v325 = vld [vmem:[%s1] sm:$0xff]
        %v326 = vld [vmem:[%s1 + $0x8] sm:$0xff]
        %v327 = vld [vmem:[%s1 + $0x10] sm:$0xff]
        %v328 = vld [vmem:[%s1 + $0x18] sm:$0xff]
        %v345 = vlaneseq
        %v346 = vand.u32 %v345, 127
        %v347 = vlaneseq
        %v348 = vshrl.u32 %v347, 7
        %v349 = vsub.s32 %v346, %v348
        %v350 = vrot.slane %v309, %v349
        %v351 = vadd.s32 %v346, 4294967288
        %v352 = vlaneseq
        %v353 = vshrl.u32 %v352, 7
        %v354 = vsub.s32 %v351, %v353
        %v355 = vrot.slane %v310, %v354
        %vm356 = vcmask 130112
        %v357 = vsel %vm356, %v355, %v350
        %v358 = vadd.s32 %v346, 4294967280
        %v359 = vlaneseq
        %v360 = vshrl.u32 %v359, 7
        %v361 = vsub.s32 %v358, %v360
        %v362 = vrot.slane %v311, %v361
        %vm363 = vcmask 195712
        %v364 = vsel %vm363, %v362, %v357
        %v365 = vadd.s32 %v346, 4294967272
        %v366 = vlaneseq
        %v367 = vshrl.u32 %v366, 7
        %v368 = vsub.s32 %v365, %v367
        %v369 = vrot.slane %v312, %v368
        %vm370 = vcmask 261312
        %v371 = vsel %vm370, %v369, %v364
        %v372 = vlaneseq
        %v373 = vshrl.u32 %v372, 7
        %v374 = vsub.s32 %v346, %v373
        %v375 = vrot.slane %v313, %v374
        %v376 = vlaneseq
        %v377 = vshrl.u32 %v376, 7
        %v378 = vsub.s32 %v351, %v377
        %v379 = vrot.slane %v314, %v378
        %v380 = vsel %vm356, %v379, %v375
        %v381 = vlaneseq
        %v382 = vshrl.u32 %v381, 7
        %v383 = vsub.s32 %v358, %v382
        %v384 = vrot.slane %v315, %v383
        %v385 = vsel %vm363, %v384, %v380
        %v386 = vlaneseq
        %v387 = vshrl.u32 %v386, 7
        %v388 = vsub.s32 %v365, %v387
        %v389 = vrot.slane %v316, %v388
        %v390 = vsel %vm370, %v389, %v385
        %v391 = vlaneseq
        %v392 = vshrl.u32 %v391, 7
        %v393 = vsub.s32 %v346, %v392
        %v394 = vrot.slane %v317, %v393
        %v395 = vlaneseq
        %v396 = vshrl.u32 %v395, 7
        %v397 = vsub.s32 %v351, %v396
        %v398 = vrot.slane %v318, %v397
        %v399 = vsel %vm356, %v398, %v394
        %v400 = vlaneseq
        %v401 = vshrl.u32 %v400, 7
        %v402 = vsub.s32 %v358, %v401
        %v403 = vrot.slane %v319, %v402
        %v404 = vsel %vm363, %v403, %v399
        %v405 = vlaneseq
        %v406 = vshrl.u32 %v405, 7
        %v407 = vsub.s32 %v365, %v406
        %v408 = vrot.slane %v320, %v407
        %v409 = vsel %vm370, %v408, %v404
        %v410 = vlaneseq
        %v411 = vshrl.u32 %v410, 7
        %v412 = vsub.s32 %v346, %v411
        %v413 = vrot.slane %v321, %v412
        %v414 = vlaneseq
        %v415 = vshrl.u32 %v414, 7
        %v416 = vsub.s32 %v351, %v415
        %v417 = vrot.slane %v322, %v416
        %v418 = vsel %vm356, %v417, %v413
        %v419 = vlaneseq
        %v420 = vshrl.u32 %v419, 7
        %v421 = vsub.s32 %v358, %v420
        %v422 = vrot.slane %v323, %v421
        %v423 = vsel %vm363, %v422, %v418
        %v424 = vlaneseq
        %v425 = vshrl.u32 %v424, 7
        %v426 = vsub.s32 %v365, %v425
        %v427 = vrot.slane %v324, %v426
        %v428 = vsel %vm370, %v427, %v423
        %vm429 = vcmask 1041409
        %v430 = vsel %vm429, %v390, %v371
        %vm431 = vcmask 1042434
        %v432 = vsel %vm431, %v409, %v430
        %vm433 = vcmask 1043459
        %v434 = vsel %vm433, %v428, %v432
        %vm435 = vcmask 261120
        %v436 = vsel %vm435, %v434, 0
        %438 = vmatprep.subr.mxu0 0.0
        %439 = vmatpush1.msra.mxu0 %v325
        %440 = vmatprep.subr.mxu0 0.0
        %441 = vmatpush1.msra.mxu0 %v326
        %442 = vmatprep.subr.mxu0 0.0
        %443 = vmatpush1.msra.mxu0 %v327
        %444 = vmatprep.subr.mxu0 0.0
        %445 = vmatpush1.msra.mxu0 %v328
        %446 = vmatprep.subr.mxu0 0.0
        %447 = vmatpush1.msra.mxu0 0.0
        %448 = vmatprep.subr.mxu0 0.0
        %449 = vmatpush1.msra.mxu0 0.0
        %450 = vmatprep.subr.mxu0 0.0
        %451 = vmatpush1.msra.mxu0 0.0
        %452 = vmatprep.subr.mxu0 0.0
        %453 = vmatpush1.msra.mxu0 0.0
        %454 = vmatprep.subr.mxu0 0.0
        %455 = vmatpush1.msra.mxu0 0.0
        %456 = vmatprep.subr.mxu0 0.0
        %457 = vmatpush1.msra.mxu0 0.0
        %458 = vmatprep.subr.mxu0 0.0
        %459 = vmatpush1.msra.mxu0 0.0
        %460 = vmatprep.subr.mxu0 0.0
        %461 = vmatpush1.msra.mxu0 0.0
        %462 = vmatprep.subr.mxu0 0.0
        %463 = vmatpush1.msra.mxu0 0.0
        %464 = vmatprep.subr.mxu0 0.0
        %465 = vmatpush1.msra.mxu0 0.0
        %466 = vmatprep.subr.mxu0 0.0
        %467 = vmatpush1.msra.mxu0 0.0
        %468 = vmatprep.subr.mxu0 0.0
        %469 = vmatpush1.msra.mxu0 0.0
        %470 = vmatprep.subr.mxu0 0.0
        %471 = vmatpush1.msra.mxu0 0.0
        %472 = vmatprep.subr.mxu0 0.0
        %473 = vmatpush1.msra.mxu0 0.0
        %474 = vmatprep.subr.mxu0 0.0
        %475 = vmatpush1.msra.mxu0 0.0
        %476 = vmatprep.subr.mxu0 0.0
        %477 = vmatpush1.msra.mxu0 0.0
        %478 = vmatprep.subr.mxu0 0.0
        %479 = vmatpush1.msra.mxu0 0.0
        %480 = vmatprep.subr.mxu0 0.0
        %481 = vmatpush1.msra.mxu0 0.0
        %482 = vmatprep.subr.mxu0 0.0
        %483 = vmatpush1.msra.mxu0 0.0
        %484 = vmatprep.subr.mxu0 0.0
        %485 = vmatpush1.msra.mxu0 0.0
        %486 = vmatprep.subr.mxu0 0.0
        %487 = vmatpush1.msra.mxu0 0.0
        %488 = vmatprep.subr.mxu0 0.0
        %489 = vmatpush1.msra.mxu0 0.0
        %490 = vmatprep.subr.mxu0 0.0
        %491 = vmatpush1.msra.mxu0 0.0
        %492 = vmatprep.subr.mxu0 0.0
        %493 = vmatpush1.msra.mxu0 0.0
        %494 = vmatprep.subr.mxu0 0.0
        %495 = vmatpush1.msra.mxu0 0.0
        %496 = vmatprep.subr.mxu0 0.0
        %497 = vmatpush1.msra.mxu0 0.0
        %498 = vmatprep.subr.mxu0 0.0
        %499 = vmatpush1.msra.mxu0 0.0
        %500 = vmatprep.subr.mxu0 0.0
        %501 = vmatpush1.msra.mxu0 0.0
        %502 = vmatprep.mubr.f32.mxu0 0.0
        %503 = vmatmul.mubr.f32.gmra.mrb[0].mxu0 %v436
        %v504 = vpop.f32.mrb[0].mxu0
        %v505 = vadd.f32 0.0, %v504
        %v506 = vpop.f32.mrb[0].mxu0
        %507 = vdwg.mxu0
        %v508 = vld [vmem:[%s2] sm:$0x1]
        %vm509 = vcmp.gt.f32.partialorder %v505, 0.0
        %v511 = vlaneseq
        %v512 = vshrl.u32 %v511, 7
        %v513 = vsub.s32 0, %v512
        %v514 = vrot.slane %v508, %v513
        %v516 = vmul.f32 %v514, %v505
        %v517 = vsel %vm509, %v505, %v516
        %v518 = vld [vmem:[%s3] sm:$0x3]
        %vm519 = vcmask 15360
        %v521 = vsel %vm519, %v517, 0
        %vm523 = vcmask 1041408
        %v525 = vsel %vm523, %v518, 0
        %527 = vmatprep.subr.mxu0 0.0
        %528 = vmatpush1.msra.mxu0 %v525
        %529 = vmatprep.subr.mxu0 0.0
        %530 = vmatpush1.msra.mxu0 0.0
        %531 = vmatprep.subr.mxu0 0.0
        %532 = vmatpush1.msra.mxu0 0.0
        %533 = vmatprep.subr.mxu0 0.0
        %534 = vmatpush1.msra.mxu0 0.0
        %535 = vmatprep.subr.mxu0 0.0
        %536 = vmatpush1.msra.mxu0 0.0
        %537 = vmatprep.subr.mxu0 0.0
        %538 = vmatpush1.msra.mxu0 0.0
        %539 = vmatprep.subr.mxu0 0.0
        %540 = vmatpush1.msra.mxu0 0.0
        %541 = vmatprep.subr.mxu0 0.0
        %542 = vmatpush1.msra.mxu0 0.0
        %543 = vmatprep.subr.mxu0 0.0
        %544 = vmatpush1.msra.mxu0 0.0
        %545 = vmatprep.subr.mxu0 0.0
        %546 = vmatpush1.msra.mxu0 0.0
        %547 = vmatprep.subr.mxu0 0.0
        %548 = vmatpush1.msra.mxu0 0.0
        %549 = vmatprep.subr.mxu0 0.0
        %550 = vmatpush1.msra.mxu0 0.0
        %551 = vmatprep.subr.mxu0 0.0
        %552 = vmatpush1.msra.mxu0 0.0
        %553 = vmatprep.subr.mxu0 0.0
        %554 = vmatpush1.msra.mxu0 0.0
        %555 = vmatprep.subr.mxu0 0.0
        %556 = vmatpush1.msra.mxu0 0.0
        %557 = vmatprep.subr.mxu0 0.0
        %558 = vmatpush1.msra.mxu0 0.0
        %559 = vmatprep.subr.mxu0 0.0
        %560 = vmatpush1.msra.mxu0 0.0
        %561 = vmatprep.subr.mxu0 0.0
        %562 = vmatpush1.msra.mxu0 0.0
        %563 = vmatprep.subr.mxu0 0.0
        %564 = vmatpush1.msra.mxu0 0.0
        %565 = vmatprep.subr.mxu0 0.0
        %566 = vmatpush1.msra.mxu0 0.0
        %567 = vmatprep.subr.mxu0 0.0
        %568 = vmatpush1.msra.mxu0 0.0
        %569 = vmatprep.subr.mxu0 0.0
        %570 = vmatpush1.msra.mxu0 0.0
        %571 = vmatprep.subr.mxu0 0.0
        %572 = vmatpush1.msra.mxu0 0.0
        %573 = vmatprep.subr.mxu0 0.0
        %574 = vmatpush1.msra.mxu0 0.0
        %575 = vmatprep.subr.mxu0 0.0
        %576 = vmatpush1.msra.mxu0 0.0
        %577 = vmatprep.subr.mxu0 0.0
        %578 = vmatpush1.msra.mxu0 0.0
        %579 = vmatprep.subr.mxu0 0.0
        %580 = vmatpush1.msra.mxu0 0.0
        %581 = vmatprep.subr.mxu0 0.0
        %582 = vmatpush1.msra.mxu0 0.0
        %583 = vmatprep.subr.mxu0 0.0
        %584 = vmatpush1.msra.mxu0 0.0
        %585 = vmatprep.subr.mxu0 0.0
        %586 = vmatpush1.msra.mxu0 0.0
        %587 = vmatprep.subr.mxu0 0.0
        %588 = vmatpush1.msra.mxu0 0.0
        %589 = vmatprep.subr.mxu0 0.0
        %590 = vmatpush1.msra.mxu0 0.0
        %591 = vmatprep.mubr.f32.mxu0 0.0
        %592 = vmatmul.mubr.f32.gmra.mrb[0].mxu0 %v521
        %v593 = vpop.f32.mrb[0].mxu0
        %v594 = vadd.f32 0.0, %v593
        %v595 = vpop.f32.mrb[0].mxu0
        %596 = vdwg.mxu0
        %v597 = vxor.u32 %v594, 2147483648
        %v598 = vmul.f32 %v597, 1.442695
        %v599 = vpow.pop %v598
        %v600 = vadd.f32 %v599, 1.0
        %v601 = vrcp.pop %v600
        %v602 = vmul.f32 1.0, %v601
        %v603 = vmax.f32 %v260, %v261
        %v604 = vmax.f32 %v603, %v262
        %v605 = vmax.f32 %v604, %v263
        %v606 = vrot.slane %v605, 4
        %v607 = vmax.f32 %v605, %v606
        %v608 = vrot.slane %v607, 2
        %v609 = vmax.f32 %v607, %v608
        %v610 = vrot.slane %v609, 1
        %v611 = vmax.f32 %v609, %v610
        %v612 = vmax.f32 %v264, %v265
        %v613 = vmax.f32 %v612, %v266
        %v614 = vmax.f32 %v613, %v267
        %v615 = vrot.slane %v614, 4
        %v616 = vmax.f32 %v614, %v615
        %v617 = vrot.slane %v616, 2
        %v618 = vmax.f32 %v616, %v617
        %v619 = vrot.slane %v618, 1
        %v620 = vmax.f32 %v618, %v619
        %v621 = vmax.f32 %v268, %v269
        %v622 = vmax.f32 %v621, %v270
        %v623 = vmax.f32 %v622, %v271
        %v624 = vrot.slane %v623, 4
        %v625 = vmax.f32 %v623, %v624
        %v626 = vrot.slane %v625, 2
        %v627 = vmax.f32 %v625, %v626
        %v628 = vrot.slane %v627, 1
        %v629 = vmax.f32 %v627, %v628
        %v630 = vmax.f32 %v272, %v273
        %v631 = vmax.f32 %v630, %v274
        %v632 = vmax.f32 %v631, %v275
        %v633 = vrot.slane %v632, 4
        %v634 = vmax.f32 %v632, %v633
        %v635 = vrot.slane %v634, 2
        %v636 = vmax.f32 %v634, %v635
        %v637 = vrot.slane %v636, 1
        %v638 = vmax.f32 %v636, %v637
        %s639 = sld [smem:[#allocation6 + $0x3]]
        %v640 = vstv %s639
        %v641 = vmul.f32 %v640, %v611
        %v642 = vmul.f32 %v640, %v620
        %v643 = vmul.f32 %v640, %v629
        %v644 = vmul.f32 %v640, %v638
        %v649 = vsel %vm429, %v620, %v611
        %v650 = vsel %vm431, %v629, %v649
        %v651 = vsel %vm433, %v638, %v650
        %653 = vrot.lane.b32.xlu0 %v651, 3
        %v654 = vpop.permute.xlu0 %653
        %vm655 = vcmp.ge.s32.totalorder %v346, 3
        %s656 = sld [smem:[#allocation6]]
        %v657 = vsel %vm655, 1, 0
        %vm658 = vcmp.eq.s32.totalorder %v657, 1
        %v659 = vsel %vm658, %v654, 0.0
        %v660 = vstv %s656
        %v661 = vmul.f32 %v660, %v659
        %v663 = vrot.slane %v661, 1
        %v664 = vrot.slane %v661, 2
        %v665 = vrot.slane %v661, 3
        %v670 = vadd.f32 %v641, %v661
        %v671 = vadd.f32 %v642, %v663
        %v672 = vadd.f32 %v643, %v664
        %v673 = vadd.f32 %v644, %v665
        %674 = vrot.lane.b32.xlu0 %v651, 2
        %v675 = vpop.permute.xlu0 %674
        %vm676 = vcmp.ge.s32.totalorder %v346, 2
        %s677 = sld [smem:[#allocation6 + $0x1]]
        %v678 = vsel %vm676, 1, 0
        %vm679 = vcmp.eq.s32.totalorder %v678, 1
        %v680 = vsel %vm679, %v675, 0.0
        %v681 = vstv %s677
        %v682 = vmul.f32 %v681, %v680
        %v684 = vrot.slane %v682, 1
        %v685 = vrot.slane %v682, 2
        %v686 = vrot.slane %v682, 3
        %v691 = vadd.f32 %v670, %v682
        %v692 = vadd.f32 %v671, %v684
        %v693 = vadd.f32 %v672, %v685
        %v694 = vadd.f32 %v673, %v686
        %695 = vrot.lane.b32.xlu0 %v651, 1
        %v696 = vpop.permute.xlu0 %695
        %vm697 = vcmp.ge.s32.totalorder %v346, 1
        %s698 = sld [smem:[#allocation6 + $0x2]]
        %v699 = vsel %vm697, 1, 0
        %vm700 = vcmp.eq.s32.totalorder %v699, 1
        %v701 = vsel %vm700, %v696, 0.0
        %v702 = vstv %s698
        %v703 = vmul.f32 %v702, %v701
        %v705 = vrot.slane %v703, 1
        %v706 = vrot.slane %v703, 2
        %v707 = vrot.slane %v703, 3
        %v712 = vadd.f32 %v691, %v703
        %v713 = vadd.f32 %v692, %v705
        %v714 = vadd.f32 %v693, %v706
        %v715 = vadd.f32 %v694, %v707
        %716 = vrot.lane.b32.xlu0 %v651, 127
        %v717 = vpop.permute.xlu0 %716
        %vm718 = vcmp.lt.s32.totalorder %v346, 127
        %s719 = sld [smem:[#allocation6 + $0x4]]
        %v720 = vsel %vm718, 1, 0
        %vm721 = vcmp.eq.s32.totalorder %v720, 1
        %v722 = vsel %vm721, %v717, 0.0
        %v723 = vstv %s719
        %v724 = vmul.f32 %v723, %v722
        %v726 = vrot.slane %v724, 1
        %v727 = vrot.slane %v724, 2
        %v728 = vrot.slane %v724, 3
        %v733 = vadd.f32 %v712, %v724
        %v734 = vadd.f32 %v713, %v726
        %v735 = vadd.f32 %v714, %v727
        %v736 = vadd.f32 %v715, %v728
        %737 = vrot.lane.b32.xlu0 %v651, 126
        %v738 = vpop.permute.xlu0 %737
        %vm739 = vcmp.lt.s32.totalorder %v346, 126
        %s740 = sld [smem:[#allocation6 + $0x5]]
        %v741 = vsel %vm739, 1, 0
        %vm742 = vcmp.eq.s32.totalorder %v741, 1
        %v743 = vsel %vm742, %v738, 0.0
        %v744 = vstv %s740
        %v745 = vmul.f32 %v744, %v743
        %v747 = vrot.slane %v745, 1
        %v748 = vrot.slane %v745, 2
        %v749 = vrot.slane %v745, 3
        %v754 = vadd.f32 %v733, %v745
        %v755 = vadd.f32 %v734, %v747
        %v756 = vadd.f32 %v735, %v748
        %v757 = vadd.f32 %v736, %v749
        %758 = vrot.lane.b32.xlu0 %v651, 125
        %v759 = vpop.permute.xlu0 %758
        %vm760 = vcmp.lt.s32.totalorder %v346, 125
        %s761 = sld [smem:[#allocation6 + $0x6]]
        %v762 = vsel %vm760, 1, 0
        %vm763 = vcmp.eq.s32.totalorder %v762, 1
        %v764 = vsel %vm763, %v759, 0.0
        %v765 = vstv %s761
        %v766 = vmul.f32 %v765, %v764
        %v768 = vrot.slane %v766, 1
        %v769 = vrot.slane %v766, 2
        %v770 = vrot.slane %v766, 3
        %v775 = vadd.f32 %v754, %v766
        %v776 = vadd.f32 %v755, %v768
        %v777 = vadd.f32 %v756, %v769
        %v778 = vadd.f32 %v757, %v770
        %v779 = vxor.u32 %v775, 2147483648
        %v780 = vxor.u32 %v776, 2147483648
        %v781 = vxor.u32 %v777, 2147483648
        %v782 = vxor.u32 %v778, 2147483648
        %v783 = vmul.f32 %v779, 1.442695
        %v784 = vpow.pop %v783
        %v785 = vmul.f32 %v780, 1.442695
        %v786 = vpow.pop %v785
        %v787 = vmul.f32 %v781, 1.442695
        %v788 = vpow.pop %v787
        %v789 = vmul.f32 %v782, 1.442695
        %v790 = vpow.pop %v789
        %v791 = vadd.f32 %v784, 1.0
        %v792 = vadd.f32 %v786, 1.0
        %v793 = vadd.f32 %v788, 1.0
        %v794 = vadd.f32 %v790, 1.0
        %v795 = vrcp.pop %v791
        %v796 = vmul.f32 1.0, %v795
        %v797 = vrcp.pop %v792
        %v798 = vmul.f32 1.0, %v797
        %v799 = vrcp.pop %v793
        %v800 = vmul.f32 1.0, %v799
        %v801 = vrcp.pop %v794
        %v802 = vmul.f32 1.0, %v801
        %v803 = vlaneseq
        %v804 = vshrl.u32 %v803, 7
        %v805 = vsub.s32 0, %v804
        %v806 = vrot.slane %v602, %v805
        %808 = vbcast.lane.b32.xlu0 %v806, 256
        %v809 = vpop.permute.xlu0 %808
        %s811 = sor.u32 256, 8
        %812 = vbcast.lane.b32.xlu0 %v806, %s811
        %v813 = vpop.permute.xlu0 %812
        %s815 = sor.u32 256, 16
        %816 = vbcast.lane.b32.xlu0 %v806, %s815
        %v817 = vpop.permute.xlu0 %816
        %s819 = sor.u32 256, 24
        %820 = vbcast.lane.b32.xlu0 %v806, %s819
        %v821 = vpop.permute.xlu0 %820
        %v822 = vlaneseq
        %v823 = vshrl.u32 %v822, 7
        %v824 = vsub.s32 1, %v823
        %v825 = vrot.slane %v602, %v824
        %827 = vbcast.lane.b32.xlu0 %v825, 256
        %v828 = vpop.permute.xlu0 %827
        %s830 = sor.u32 256, 8
        %831 = vbcast.lane.b32.xlu0 %v825, %s830
        %v832 = vpop.permute.xlu0 %831
        %s834 = sor.u32 256, 16
        %835 = vbcast.lane.b32.xlu0 %v825, %s834
        %v836 = vpop.permute.xlu0 %835
        %s838 = sor.u32 256, 24
        %839 = vbcast.lane.b32.xlu0 %v825, %s838
        %v840 = vpop.permute.xlu0 %839
        %v841 = vlaneseq
        %v842 = vshrl.u32 %v841, 7
        %v843 = vsub.s32 2, %v842
        %v844 = vrot.slane %v602, %v843
        %846 = vbcast.lane.b32.xlu0 %v844, 256
        %v847 = vpop.permute.xlu0 %846
        %s849 = sor.u32 256, 8
        %850 = vbcast.lane.b32.xlu0 %v844, %s849
        %v851 = vpop.permute.xlu0 %850
        %s853 = sor.u32 256, 16
        %854 = vbcast.lane.b32.xlu0 %v844, %s853
        %v855 = vpop.permute.xlu0 %854
        %s857 = sor.u32 256, 24
        %858 = vbcast.lane.b32.xlu0 %v844, %s857
        %v859 = vpop.permute.xlu0 %858
        %v860 = vlaneseq
        %v861 = vshrl.u32 %v860, 7
        %v862 = vsub.s32 3, %v861
        %v863 = vrot.slane %v602, %v862
        %865 = vbcast.lane.b32.xlu0 %v863, 256
        %v866 = vpop.permute.xlu0 %865
        %s868 = sor.u32 256, 8
        %869 = vbcast.lane.b32.xlu0 %v863, %s868
        %v870 = vpop.permute.xlu0 %869
        %s872 = sor.u32 256, 16
        %873 = vbcast.lane.b32.xlu0 %v863, %s872
        %v874 = vpop.permute.xlu0 %873
        %s876 = sor.u32 256, 24
        %877 = vbcast.lane.b32.xlu0 %v863, %s876
        %v878 = vpop.permute.xlu0 %877
        %v879 = vlaneseq
        %v880 = vshrl.u32 %v879, 7
        %v881 = vsub.s32 0, %v880
        %v882 = vrot.slane %v796, %v881
        %v883 = vlaneseq
        %v884 = vshrl.u32 %v883, 7
        %v885 = vsub.s32 0, %v884
        %v886 = vrot.slane %v798, %v885
        %v887 = vlaneseq
        %v888 = vshrl.u32 %v887, 7
        %v889 = vsub.s32 0, %v888
        %v890 = vrot.slane %v800, %v889
        %v891 = vlaneseq
        %v892 = vshrl.u32 %v891, 7
        %v893 = vsub.s32 0, %v892
        %v894 = vrot.slane %v802, %v893
        %v895 = vmul.f32 %v809, %v882
        %v896 = vmul.f32 %v813, %v882
        %v897 = vmul.f32 %v817, %v882
        %v898 = vmul.f32 %v821, %v882
        %v899 = vmul.f32 %v828, %v886
        %v900 = vmul.f32 %v832, %v886
        %v901 = vmul.f32 %v836, %v886
        %v902 = vmul.f32 %v840, %v886
        %v903 = vmul.f32 %v847, %v890
        %v904 = vmul.f32 %v851, %v890
        %v905 = vmul.f32 %v855, %v890
        %v906 = vmul.f32 %v859, %v890
        %v907 = vmul.f32 %v866, %v894
        %v908 = vmul.f32 %v870, %v894
        %v909 = vmul.f32 %v874, %v894
        %v910 = vmul.f32 %v878, %v894
        %v911 = vmul.f32 %v895, %v260
        %v912 = vmul.f32 %v896, %v261
        %v913 = vmul.f32 %v897, %v262
        %v914 = vmul.f32 %v898, %v263
        %v915 = vmul.f32 %v899, %v264
        %v916 = vmul.f32 %v900, %v265
        %v917 = vmul.f32 %v901, %v266
        %v918 = vmul.f32 %v902, %v267
        %v919 = vmul.f32 %v903, %v268
        %v920 = vmul.f32 %v904, %v269
        %v921 = vmul.f32 %v905, %v270
        %v922 = vmul.f32 %v906, %v271
        %v923 = vmul.f32 %v907, %v272
        %v924 = vmul.f32 %v908, %v273
        %v925 = vmul.f32 %v909, %v274
        %v926 = vmul.f32 %v910, %v275
        %927 = vst [vmem:[%s257] sm:$0xff] %v911
        %928 = vst [vmem:[%s257 + $0x8] sm:$0xff] %v912
        %929 = vst [vmem:[%s257 + $0x10] sm:$0xff] %v913
        %930 = vst [vmem:[%s257 + $0x18] sm:$0xff] %v914
        %931 = vst [vmem:[%s257 + $0x20] sm:$0xff] %v915
        %932 = vst [vmem:[%s257 + $0x28] sm:$0xff] %v916
        %933 = vst [vmem:[%s257 + $0x30] sm:$0xff] %v917
        %934 = vst [vmem:[%s257 + $0x38] sm:$0xff] %v918
        %935 = vst [vmem:[%s257 + $0x40] sm:$0xff] %v919
        %936 = vst [vmem:[%s257 + $0x48] sm:$0xff] %v920
        %937 = vst [vmem:[%s257 + $0x50] sm:$0xff] %v921
        %938 = vst [vmem:[%s257 + $0x58] sm:$0xff] %v922
        %939 = vst [vmem:[%s257 + $0x60] sm:$0xff] %v923
        %940 = vst [vmem:[%s257 + $0x68] sm:$0xff] %v924
        %941 = vst [vmem:[%s257 + $0x70] sm:$0xff] %v925
        %942 = vst [vmem:[%s257 + $0x78] sm:$0xff] %v926
        %s943 = sand.u32 %s141, 1
        %s944 = scalar_lea.sflag [#allocation4], %s943
        %s945 = sand.u32 %s141, 1
        %s946 = smul.addr %s945, 128
        %s947 = scalar_lea.vmem [#allocation7], %s946
        // Predicated region
        $region49: #{tpu_custom_call.1} parent=39 // pred_check
          %p948 = pneg %p151
        $region50: #{tpu_custom_call.1} parent=39 // pred_check_branch
          %950 = sbr.rel (%p948) target = $region52
        $region51: #{tpu_custom_call.1} parent=39 // pred_region
          %s951 = smul.u32 4, %s23
          %s953 = ssub.s32 2048, 2048
          %954 = vsyncadd %s944, %s953
          %s955 = smul.addr %s951, 4
          %s956 = smul.addr %s955, 128
          %s957 = scalar_lea.hbm %s5, %s956
          %s958 = sshll.u32 %s947, 4
          %s959 = int_to_ptr.vmem [resolvable:$true] %s958
          %964 = dma.vmem_to_hbm [thread:$0]  %s959, 2048, %s957, %s944, 128, 128, 8
        $region52: #{tpu_custom_call.1} parent=39 // pred_fallthru
          _
      $region40: #{tpu_custom_call.1} parent=5 // pred_fallthru
        _
      %p965 = scmp.le.s32.totalorder 2, %s18
      // Predicated region
      $region53: #{tpu_custom_call.1} parent=5 // pred_check
        %p966 = pneg %p965
      $region54: #{tpu_custom_call.1} parent=5 // pred_check_branch
        %968 = sbr.rel (%p966) target = $region56
      $region55: #{tpu_custom_call.1} parent=5 // pred_region
        %s969 = ssub.s32 %s18, 2
        // Predicated region
        $region57: #{tpu_custom_call.1} parent=55 // pred_check
          %p970 = pneg %p157
        $region58: #{tpu_custom_call.1} parent=55 // pred_check_branch
          %972 = sbr.rel (%p970) target = $region60
        $region59: #{tpu_custom_call.1} parent=55 // pred_region
          %s973 = sand.u32 %s142, 1
          %s974 = scalar_lea.sflag [#allocation4], %s973
          %s975 = sand.u32 %s142, 1
          %s976 = smul.addr %s975, 128
          %s977 = scalar_lea.vmem [#allocation7], %s976
          %978 = dma.done %s974, 2048
        $region60: #{tpu_custom_call.1} parent=55 // pred_fallthru
          _
      $region56: #{tpu_custom_call.1} parent=5 // pred_fallthru
        _
    $region6: #{tpu_custom_call.1} parent=1 // loop_footer
      %s22 = sadd.s32 1, %s18
    $region7: #{tpu_custom_call.1} parent=1 // loop_footer_branch
      %17 = sbr.rel target = $region3
    $region8: #{tpu_custom_call.1} parent=1 // loop_exit
      _
    %979 = vsyncpa [#allocation3], 1
    %s980 = scalar_lea.sflag [#allocation3], 1
    %981 = vsyncpa %s980, 1
    %982 = vsyncpa [#allocation4], 1
    %s983 = scalar_lea.sflag [#allocation4], 1
    %984 = vsyncpa %s983, 1
    %985 = vsyncpa [#allocation5], 1
    %s986 = scalar_lea.sflag [#allocation5], 1
    %987 = vsyncpa %s986, 1

</llo_original>
